<compile_context>
chip_gen: v5e
topology: v5e:2x2
jax: 0.10.0
libtpu: 0.0.40
codegen_flags: <defaults>
</compile_context>

<pallas_src>
import math
from functools import partial

import jax
import jax.numpy as jnp
from jax.experimental import pallas as pl
from jax.experimental.pallas import tpu as pltpu


def _round_up(x, m):
    return ((x + m - 1) // m) * m


def _lane_pack_factor(D):
    """How many logical rows to fold into one lane-dense (multiple-of-128) packed row."""
    if D % 128 == 0:
        return 1
    pack = 128 // math.gcd(D, 128)
    # Keep the block-diagonal packed weight small; otherwise stay unpacked (still correct,
    # just masked partial stores on the output).
    if 2 * pack * pack * D * 4 > (4 << 20):
        return 1
    return pack


def pack_linear_params(weight, bias, pack):
    """weight: (D, 2) PyTorch nn.Linear layout, bias: (D,).
    Returns (w_packed: (2*pack, pack*D) f32 block-diagonal, b_packed: (1, pack*D) f32).
    For static model weights this should be hoisted and computed once per model."""
    D = weight.shape[0]
    w = weight.T.astype(jnp.float32)                                 # (2, D)
    if pack == 1:
        return w, bias.astype(jnp.float32).reshape(1, D)
    w_packed = jnp.kron(jnp.eye(pack, dtype=jnp.float32), w)        # (2*pack, pack*D)
    b_packed = jnp.tile(bias.astype(jnp.float32).reshape(1, D), (1, pack))
    return w_packed, b_packed


def _scale_encoding_kernel(x_ref, s_ref, w_ref, b_ref, o_ref, *, use_mxu):
    s = s_ref[...].astype(jnp.float32)                 # (tm, K)
    w = w_ref[...]                                     # (K, dlane), f32
    if use_mxu:
        # Tiny contraction on the otherwise-idle MXU keeps the VALU slot free (v7x / bf16).
        proj = jnp.dot(s, w, preferred_element_type=jnp.float32)
    else:
        # K == 2: two broadcast FMAs on the VPU (exact f32).
        proj = s[:, 0:1] * w[0:1, :] + s[:, 1:2] * w[1:2, :]
    proj = proj + b_ref[...]                           # (1, dlane) broadcasts over sublanes
    # Add at x's dtype: avoids upcasting the whole (tm, dlane) tile when x is bf16.
    o_ref[...] = x_ref[...] + proj.astype(o_ref.dtype)


def _vmem_budget_and_limit():
    """Per-generation VMEM budget (tile sizing) and scoped vmem limit."""
    cap = None
    try:
        cap = getattr(pltpu.get_tpu_info(), "vmem_capacity_bytes", None)
    except Exception:
        cap = None
    if cap is not None and cap >= (96 << 20):          # v5e / v6e: 128 MiB VMEM parts
        return 48 << 20, 96 << 20
    return 24 << 20, 48 << 20                          # v7x (64 MiB) or unknown: conservative


def scale_encoding(x, scale, weight, bias, *, packed_params=None, use_xla_for_small=True):
    """ScaleEncoding forward: x + Linear(2, D)(scale); dropout p=0.0 is a no-op.
    x: (S, B, D), scale: (S, B, 2), weight: (D, 2) [PyTorch layout], bias: (D,)."""
    S, B, D = x.shape
    M = S * B
    itemsize_x = jnp.dtype(x.dtype).itemsize
    itemsize_s = jnp.dtype(scale.dtype).itemsize

    # Tiny problems: pallas launch + per-step overhead exceeds the whole workload.
    if use_xla_for_small and M * D * itemsize_x < (256 << 10):
        proj = (scale.astype(jnp.float32) @ weight.T.astype(jnp.float32)
                + bias.astype(jnp.float32))
        return (x.astype(jnp.float32) + proj).astype(x.dtype)

    pack = _lane_pack_factor(D)
    dlane = pack * D
    K = 2 * pack
    if packed_params is None:
        packed_params = pack_linear_params(weight, bias, pack)       # hoist if weights static
    w_packed, b_packed = packed_params
    assert w_packed.shape == (K, dlane) and b_packed.shape == (1, dlane), (
        "packed_params were built with a different pack factor than _lane_pack_factor(D)")

    # --- fold `pack` logical rows into the lane axis (lane-dense, unmasked stores).
    x2 = x.reshape(M, D)                               # free (row-major view)
    s2 = scale.reshape(M, 2)
    m_p = pl.cdiv(M, pack)
    if m_p < 8:
        m_p = 8          # tiny input: pad up to 8 sublane rows (cheap; usually XLA bypass)
    rows_total = m_p * pack
    pad_rows = rows_total - M
    if pad_rows:         # at most pack-1 rows for real workloads; zero when D % 128 == 0
        x2 = jnp.pad(x2, ((0, pad_rows), (0, 0)))
        s2 = jnp.pad(s2, ((0, pad_rows), (0, 0)))
    x_packed = x2.reshape(m_p, dlane)                  # free (row-major view)
    s_packed = s2.reshape(m_p, K)

    # --- tile sizing from the per-generation VMEM budget, lane/sublane-padded accounting.
    budget, vmem_limit = _vmem_budget_and_limit()
    bytes_per_row = 2 * (dlane * itemsize_x                  # x tile (double-buffered)
                         + dlane * itemsize_x                # out tile
                         + _round_up(K, 128) * itemsize_s)   # scale tile, lane-padded to 128
    resident = 2 * (_round_up(K, 8) * dlane * 4 + 8 * dlane * 4)   # weight + bias buffers
    tm = max(8, (((budget - resident) // bytes_per_row) // 8) * 8)
    tm = min(tm, (m_p // 8) * 8)      # block never exceeds the array; ragged last block only
    grid = pl.cdiv(m_p, tm)
    # v7x megacore / pipeline steady state: prefer an even grid with >= 4 steps when the
    # problem has at least 4 tiles' worth of rows.
    if m_p >= 32 and grid < 4:
        tm = min(tm, max(8, _round_up(pl.cdiv(m_p, 4), 8)))
        grid = pl.cdiv(m_p, tm)
    if grid > 1 and grid % 2 and m_p >= 8 * (grid + 1):
        tm_alt = max(8, _round_up(pl.cdiv(m_p, grid + 1), 8))
        if pl.cdiv(m_p, tm_alt) % 2 == 0:
            tm, grid = tm_alt, pl.cdiv(m_p, tm_alt)

    use_mxu = (K > 2) or (itemsize_x < 4)

    out = pl.pallas_call(
        partial(_scale_encoding_kernel, use_mxu=use_mxu),
        out_shape=jax.ShapeDtypeStruct((m_p, dlane), x.dtype),
        grid_spec=pltpu.PrefetchScalarGridSpec(
            num_scalar_prefetch=0,
            grid=(grid,),
            in_specs=[
                pl.BlockSpec((tm, dlane), lambda i: (i, 0)),   # x rows (lane-dense)
                pl.BlockSpec((tm, K), lambda i: (i, 0)),       # scale rows
                pl.BlockSpec((K, dlane), lambda i: (0, 0)),    # packed weight (resident)
                pl.BlockSpec((1, dlane), lambda i: (0, 0)),    # packed bias (resident)
            ],
            out_specs=pl.BlockSpec((tm, dlane), lambda i: (i, 0)),
        ),
        compiler_params=pltpu.CompilerParams(
            dimension_semantics=("parallel",),
            vmem_limit_bytes=vmem_limit,
        ),
    )(x_packed, s_packed, w_packed, b_packed)

    out = out.reshape(rows_total, D)                   # free (row-major view)
    if pad_rows:
        out = out[:M]
    # dropout p=0.0 -> identity (inference); nothing to do.
    return out.reshape(S, B, D)


def _reference(x, scale, weight, bias):
    # Elementwise f32 formulation (no matmul), so the check does not depend on the MXU's
    # f32 precision mode.
    proj = scale[..., 0:1] * weight[:, 0] + scale[..., 1:2] * weight[:, 1] + bias
    return x + proj


if __name__ == "__main__":
    key = jax.random.PRNGKey(0)
    k_x, k_s, k_w, k_b, k_x2, k_s2 = jax.random.split(key, 6)

    # --- Case 1: emb_size=32 (not a multiple of 128) -> lane-packed (pack=4) + MXU path.
    S, B, D = 8, 2, 32
    x = jax.random.normal(k_x, (S, B, D), dtype=jnp.float32)
    scale = jax.random.normal(k_s, (S, B, 2), dtype=jnp.float32)
    bound = 1.0 / math.sqrt(2.0)   # nn.Linear(2, D) default init range
    weight = jax.random.uniform(k_w, (D, 2), minval=-bound, maxval=bound, dtype=jnp.float32)
    bias = jax.random.uniform(k_b, (D,), minval=-bound, maxval=bound, dtype=jnp.float32)
    # Round scale/weight to bf16-representable values so the structural check stays exact
    # regardless of whether the f32 MXU matmul internally uses bf16 passes.
    scale = scale.astype(jnp.bfloat16).astype(jnp.float32)
    weight = weight.astype(jnp.bfloat16).astype(jnp.float32)

    # Force the Pallas path even at this tiny demo shape (default would bypass to XLA).
    out = scale_encoding(x, scale, weight, bias, use_xla_for_small=False)
    out = jax.block_until_ready(out)
    ref = _reference(x, scale, weight, bias)
    assert out.shape == (S, B, D)
    assert jnp.allclose(out, ref, atol=1e-5), "mismatch vs reference (packed / MXU path)"

    # --- Case 2: emb_size=128 (multiple of 128) -> unpacked VPU broadcast-FMA path.
    D2 = 128
    x2 = jax.random.normal(k_x2, (S, B, D2), dtype=jnp.float32)
    scale2 = jax.random.normal(k_s2, (S, B, 2), dtype=jnp.float32)
    weight2 = jax.random.uniform(k_w, (D2, 2), minval=-bound, maxval=bound, dtype=jnp.float32)
    bias2 = jax.random.uniform(k_b, (D2,), minval=-bound, maxval=bound, dtype=jnp.float32)
    out2 = scale_encoding(x2, scale2, weight2, bias2, use_xla_for_small=False)
    out2 = jax.block_until_ready(out2)
    ref2 = _reference(x2, scale2, weight2, bias2)
    assert jnp.allclose(out2, ref2, atol=1e-5), "mismatch vs reference (VPU path)"

    print("KERNEL_OK")
</pallas_src>

<mosaic_0001>
module attributes {stable_mosaic.version = 11 : i64} {
  func.func @_scale_encoding_kernel(%arg0: i32, %arg1: memref<8x128xf32, #tpu.memory_space<vmem>>, %arg2: memref<8x8xf32, #tpu.memory_space<vmem>>, %arg3: memref<8x128xf32, #tpu.memory_space<vmem>>, %arg4: memref<1x128xf32, #tpu.memory_space<vmem>>, %arg5: memref<8x128xf32, #tpu.memory_space<vmem>>) attributes {dimension_semantics = [#tpu.dimension_semantics<parallel>], iteration_bounds = array<i64: 1>, scalar_prefetch = 0 : i64, scratch_operands = 0 : i64, tpu.core_type = #tpu.core_type<tc>, window_params = [{transform_indices = @transform_0, window_bounds = array<i64: 8, 128>}, {transform_indices = @transform_1, window_bounds = array<i64: 8, 8>}, {pipeline_mode = #tpu.pipeline_mode<synchronous>, transform_indices = @transform_2, window_bounds = array<i64: 8, 128>}, {pipeline_mode = #tpu.pipeline_mode<synchronous>, transform_indices = @transform_3, window_bounds = array<i64: 1, 128>}, {transform_indices = @transform_4, window_bounds = array<i64: 8, 128>}]} {
    %c0 = arith.constant 0 : index
    %c0_0 = arith.constant 0 : index
    %0 = vector.load %arg2[%c0, %c0_0] : memref<8x8xf32, #tpu.memory_space<vmem>>, vector<8x8xf32>
    %c0_1 = arith.constant 0 : index
    %c0_2 = arith.constant 0 : index
    %1 = vector.load %arg3[%c0_1, %c0_2] : memref<8x128xf32, #tpu.memory_space<vmem>>, vector<8x128xf32>
    %cst = arith.constant dense<0.000000e+00> : vector<8x128xf32>
    %2 = tpu.matmul %0, %1, %cst {dimension_numbers = #tpu.dot_dimension_numbers<[1], [0], [0], [1], [0, 0, 1, 1], [], []>} : vector<8x8xf32>, vector<8x128xf32>, vector<8x128xf32> -> vector<8x128xf32>
    %c0_3 = arith.constant 0 : index
    %c0_4 = arith.constant 0 : index
    %3 = vector.load %arg4[%c0_3, %c0_4] : memref<1x128xf32, #tpu.memory_space<vmem>>, vector<1x128xf32>
    %4 = vector.broadcast %3 : vector<1x128xf32> to vector<8x128xf32>
    %5 = arith.addf %2, %4 : vector<8x128xf32>
    %c0_5 = arith.constant 0 : index
    %c0_6 = arith.constant 0 : index
    %6 = vector.load %arg1[%c0_5, %c0_6] : memref<8x128xf32, #tpu.memory_space<vmem>>, vector<8x128xf32>
    %7 = arith.addf %6, %5 : vector<8x128xf32>
    %c0_7 = arith.constant 0 : index
    %c0_8 = arith.constant 0 : index
    %8 = vector.load %arg5[%c0_7, %c0_8] : memref<8x128xf32, #tpu.memory_space<vmem>>, vector<8x128xf32>
    tpu.vector_store %arg5[%c0_7, %c0_8], %7 {strides = array<i32>} : memref<8x128xf32, #tpu.memory_space<vmem>>, vector<8x128xf32>,
    return
  }
  func.func @transform_0(%arg0: i32) -> (i32, i32) {
    %c0_i32 = arith.constant 0 : i32
    %c0_i32_0 = arith.constant 0 : i32
    return %arg0, %c0_i32 : i32, i32
  }
  func.func @transform_1(%arg0: i32) -> (i32, i32) {
    %c0_i32 = arith.constant 0 : i32
    %c0_i32_0 = arith.constant 0 : i32
    return %arg0, %c0_i32 : i32, i32
  }
  func.func @transform_2(%arg0: i32) -> (i32, i32) {
    %c0_i32 = arith.constant 0 : i32
    %c0_i32_0 = arith.constant 0 : i32
    %c0_i32_1 = arith.constant 0 : i32
    return %c0_i32, %c0_i32_0 : i32, i32
  }
  func.func @transform_3(%arg0: i32) -> (i32, i32) {
    %c0_i32 = arith.constant 0 : i32
    %c0_i32_0 = arith.constant 0 : i32
    %c0_i32_1 = arith.constant 0 : i32
    return %c0_i32, %c0_i32_0 : i32, i32
  }
  func.func @transform_4(%arg0: i32) -> (i32, i32) {
    %c0_i32 = arith.constant 0 : i32
    %c0_i32_0 = arith.constant 0 : i32
    return %arg0, %c0_i32 : i32, i32
  }
}

</mosaic_0001>

<llo_original>
// kernel: tpu_custom_call.1
$region0: #{tpu_custom_call.1}
  #allocation0 [shape = 'u32[]', space=smem, size = 0x4, offset = 0x4, fixed_abs, tag = 'smem constant byte address 0x4 - core index']
  #allocation1 [shape = 'u32[72,128]{1,0:T(1,128)}', space=vmem, size = 0x9000, scoped, tag = 'internal scratch']
  %s0 = inlined_call_operand.hbm [shape: f32[8,128], index: 0, kind: input, shape index: {}]
  %s1 = inlined_call_operand.hbm [shape: f32[8,8], index: 1, kind: input, shape index: {}]
  %s2 = inlined_call_operand.hbm [shape: f32[8,128], index: 2, kind: input, shape index: {}]
  %s3 = inlined_call_operand.vmem [shape: f32[1,128], index: 3, kind: input, shape index: {}]
  %s4 = inlined_call_operand.hbm [shape: f32[8,128], index: 4, kind: output, shape index: {}]
  %s5 = sld [smem:[#allocation0]]
  $region38: #{tpu_custom_call.1} parent=0
    _
  %s7 = ssub.s32 1, %s5
  %s8 = scalar_select 0, %s7, %s5
  $region1: #{tpu_custom_call.1} parent=0
    #allocation2 [shape = 'u8[4096]{0}', space=vmem, size = 0x1000, scoped, tag = 'input window, operand 0, single buffered']
    #allocation3 [shape = 's32[1]{0}', space=sflag, size = 0x4, scoped, tag = 'scoped memory for tpu_custom_call.1']
    #allocation4 [shape = 's32[1]{0}', space=sflag, size = 0x4, scoped, tag = 'scoped memory for tpu_custom_call.1']
    #allocation5 [shape = 'u8[4096]{0}', space=vmem, size = 0x1000, scoped, tag = 'input window, operand 1, single buffered']
    #allocation6 [shape = 's32[1]{0}', space=sflag, size = 0x4, scoped, tag = 'scoped memory for tpu_custom_call.1']
    #allocation7 [shape = 'u8[4096]{0}', space=vmem, size = 0x1000, scoped, tag = 'input window, operand 2, single buffered']
    #allocation8 [shape = 'u8[4096]{0}', space=vmem, size = 0x1000, scoped, tag = 'output window, operand 0, single buffered']
    %9 = vsyncpa [#allocation3], 0
    %10 = vsyncpa [#allocation6], 0
    %11 = vsyncpa [#allocation4], 0
    // Predicated region
    $region2: #{tpu_custom_call.1} parent=1 // pred_check
      _
    $region3: #{tpu_custom_call.1} parent=1 // pred_check_branch
      %13 = sbr.rel (0) target = $region5
    $region4: #{tpu_custom_call.1} parent=1 // pred_region
      %15 = vsyncadd [#allocation3], 0
      %s17 = sshll.u32 %s0, 4
      %s18 = int_to_ptr.hbm [resolvable:$true] %s17
      %s19 = sshll.u32 [#allocation2], 4
      %s20 = int_to_ptr.vmem [resolvable:$true] %s19
      %22 = dma.hbm_to_vmem [thread:$0]  %s18, 128, %s20, [#allocation3]
    $region5: #{tpu_custom_call.1} parent=1 // pred_fallthru
      _
    // Predicated region
    $region6: #{tpu_custom_call.1} parent=1 // pred_check
      _
    $region7: #{tpu_custom_call.1} parent=1 // pred_check_branch
      %24 = sbr.rel (0) target = $region9
    $region8: #{tpu_custom_call.1} parent=1 // pred_region
      %26 = vsyncadd [#allocation6], 0
      %s28 = sshll.u32 %s1, 4
      %s29 = int_to_ptr.hbm [resolvable:$true] %s28
      %s30 = sshll.u32 [#allocation5], 4
      %s31 = int_to_ptr.vmem [resolvable:$true] %s30
      %33 = dma.hbm_to_vmem [thread:$0]  %s29, 128, %s31, [#allocation6]
    $region9: #{tpu_custom_call.1} parent=1 // pred_fallthru
      _
    // Predicated region
    $region10: #{tpu_custom_call.1} parent=1 // pred_check
      _
    $region11: #{tpu_custom_call.1} parent=1 // pred_check_branch
      %35 = sbr.rel (0) target = $region13
    $region12: #{tpu_custom_call.1} parent=1 // pred_region
      %37 = vsyncadd [#allocation6], 0
      %s39 = sshll.u32 %s2, 4
      %s40 = int_to_ptr.hbm [resolvable:$true] %s39
      %s41 = sshll.u32 [#allocation7], 4
      %s42 = int_to_ptr.vmem [resolvable:$true] %s41
      %44 = dma.hbm_to_vmem [thread:$0]  %s40, 128, %s42, [#allocation6]
    $region13: #{tpu_custom_call.1} parent=1 // pred_fallthru
      _
    // Predicated region
    $region14: #{tpu_custom_call.1} parent=1 // pred_check
      _
    $region15: #{tpu_custom_call.1} parent=1 // pred_check_branch
      %46 = sbr.rel (0) target = $region17
    $region16: #{tpu_custom_call.1} parent=1 // pred_region
      _
    $region17: #{tpu_custom_call.1} parent=1 // pred_fallthru
      _
    // Predicated region
    $region18: #{tpu_custom_call.1} parent=1 // pred_check
      _
    $region19: #{tpu_custom_call.1} parent=1 // pred_check_branch
      %48 = sbr.rel (0) target = $region21
    $region20: #{tpu_custom_call.1} parent=1 // pred_region
      %50 = dma.done [#allocation3], 128
    $region21: #{tpu_custom_call.1} parent=1 // pred_fallthru
      _
    // Predicated region
    $region22: #{tpu_custom_call.1} parent=1 // pred_check
      _
    $region23: #{tpu_custom_call.1} parent=1 // pred_check_branch
      %52 = sbr.rel (0) target = $region25
    $region24: #{tpu_custom_call.1} parent=1 // pred_region
      %54 = dma.done [#allocation6], 128
    $region25: #{tpu_custom_call.1} parent=1 // pred_fallthru
      _
    // Predicated region
    $region26: #{tpu_custom_call.1} parent=1 // pred_check
      _
    $region27: #{tpu_custom_call.1} parent=1 // pred_check_branch
      %56 = sbr.rel (0) target = $region29
    $region28: #{tpu_custom_call.1} parent=1 // pred_region
      %58 = dma.done [#allocation6], 128
    $region29: #{tpu_custom_call.1} parent=1 // pred_fallthru
      _
    %v59 = vld [vmem:[#allocation5] sm:$0xff]
    %v60 = vld [vmem:[#allocation7] sm:$0xff]
    %v61 = vld [vmem:[%s3] sm:$0x1]
    %v63 = vperm.slane %v61, 0
    %vm65 = vcmask 64512
    %v67 = vsel %vm65, %v59, 0
    %69 = vmatpush.msra.mxu0 0.0
    %70 = vmatpush.msra.mxu0 0.0
    %71 = vmatpush.msra.mxu0 0.0
    %72 = vmatpush.msra.mxu0 0.0
    %73 = vmatpush.msra.mxu0 0.0
    %74 = vmatpush.msra.mxu0 0.0
    %75 = vmatpush.msra.mxu0 0.0
    %76 = vmatpush.msra.mxu0 0.0
    %77 = vmatpush.msra.mxu0 0.0
    %78 = vmatpush.msra.mxu0 0.0
    %79 = vmatpush.msra.mxu0 0.0
    %80 = vmatpush.msra.mxu0 0.0
    %81 = vmatpush.msra.mxu0 0.0
    %82 = vmatpush.msra.mxu0 0.0
    %83 = vmatpush.msra.mxu0 0.0
    %84 = vmatpush.msra.mxu0 %v60
    %85 = vmatmul.f32.gmra.mxu0 %v67
    %v86 = vpop.f32.mrf.mxu0
    %v87 = vadd.f32 %v63, %v86
    %88 = vdwg.mxu0
    %v89 = vld [vmem:[#allocation2] sm:$0xff]
    %v90 = vadd.f32 %v89, %v87
    %91 = vst [vmem:[#allocation8] sm:$0xff] %v90
    // Predicated region
    $region30: #{tpu_custom_call.1} parent=1 // pred_check
      _
    $region31: #{tpu_custom_call.1} parent=1 // pred_check_branch
      %93 = sbr.rel (0) target = $region33
    $region32: #{tpu_custom_call.1} parent=1 // pred_region
      %95 = vsyncadd [#allocation4], 0
      %s97 = sshll.u32 [#allocation8], 4
      %s98 = int_to_ptr.vmem [resolvable:$true] %s97
      %s99 = sshll.u32 %s4, 4
      %s100 = int_to_ptr.hbm [resolvable:$true] %s99
      %102 = dma.vmem_to_hbm [thread:$0]  %s98, 128, %s100, [#allocation4]
    $region33: #{tpu_custom_call.1} parent=1 // pred_fallthru
      _
    // Predicated region
    $region34: #{tpu_custom_call.1} parent=1 // pred_check
      _
    $region35: #{tpu_custom_call.1} parent=1 // pred_check_branch
      %104 = sbr.rel (0) target = $region37
    $region36: #{tpu_custom_call.1} parent=1 // pred_region
      %106 = dma.done [#allocation4], 128
    $region37: #{tpu_custom_call.1} parent=1 // pred_fallthru
      _
    %107 = vsyncpa [#allocation3], 1
    %108 = vsyncpa [#allocation6], 1
    %109 = vsyncpa [#allocation4], 1

</llo_original>
